<compile_context>
chip_gen: v5e
topology: v5e:2x2
jax: 0.10.0
libtpu: 0.0.40
codegen_flags: <defaults>
</compile_context>

<pallas_src>
import functools

import jax
import jax.numpy as jnp
from jax.experimental import pallas as pl
from jax.experimental.pallas import tpu as pltpu


def _round_up(x, m):
    return (x + m - 1) // m * m


def attention_kernel(hidden_ref, enc_ref, wh_ref, we_ref, b_ref, v_ref,
                     out_ref, hb_ref, sc_ref, *, s_valid):
    """One (batch-tile, src-tile) grid step.

    hidden_ref: [tb, H]      decoder hidden state (batch tile)
    enc_ref:    [tS, tb, H]  encoder outputs tile, native [S, B, H] layout
    wh_ref:     [H, H]       attn weight, hidden half   (PyTorch [out, in])
    we_ref:     [H, H]       attn weight, encoder half  (PyTorch [out, in])
    b_ref:      [1, H]       attn bias
    v_ref:      [1, H]       v weight (bias-free Linear(H, 1))
    out_ref:    [tb, Sp]     attention weights, resident across the src axis
    hb_ref:     [tb, H] f32  VMEM scratch caching hidden @ Wh.T + b
    sc_ref:     [Sp, tb] f32 VMEM scratch staging raw scores (src on sublanes)
    """
    si = pl.program_id(1)
    ns = pl.num_programs(1)
    tS, tb, H = enc_ref.shape

    # Contract the feature axis with the `in` axis (dim 1) of the PyTorch weight:
    # computes x @ W.T without materializing a transposed weight copy.
    dn = (((1,), (1,)), ((), ()))

    # Hidden projection (+ bias) is invariant along the src axis: compute once
    # per batch tile and cache it in VMEM (feedback: hoist out of the S loop).
    @pl.when(si == 0)
    def _():
        hb_ref[...] = jax.lax.dot_general(
            hidden_ref[...], wh_ref[...], dn,
            preferred_element_type=jnp.float32) + b_ref[...].astype(jnp.float32)

    # Encoder projection for this src tile: one lane-filled MXU matmul over all
    # tS*tb rows (leading-dim merge is layout preserving since tb % 8 == 0).
    e_rows = enc_ref[...].reshape(tS * tb, H)
    e_proj = jax.lax.dot_general(e_rows, we_ref[...], dn,
                                 preferred_element_type=jnp.float32)

    # energy = tanh(enc @ We.T + hidden @ Wh.T + b)   (f32: safe on v5e too)
    energy = jnp.tanh(e_proj.reshape(tS, tb, H) + hb_ref[...])

    # v-projection: VPU multiply + XLU lane (H) reduction -> [tS, tb].
    scores = jnp.sum(energy * v_ref[...].astype(jnp.float32), axis=-1)

    # Stage raw scores with src on the sublane axis; the dynamic offset is a
    # multiple of the tile size (aligned sublane store).
    start = pl.multiple_of(si * tS, tS)
    sc_ref[pl.ds(start, tS), :] = scores

    # Finalize: masked, numerically stable softmax over the full src axis,
    # written once per batch tile as a lane-dense [tb, Sp] block.
    @pl.when(si == ns - 1)
    def _():
        s_all = sc_ref[...].T                      # [tb, Sp]: one XLU transpose
        if s_valid < s_all.shape[-1]:              # static: mask zero-padded src
            lane = jax.lax.broadcasted_iota(jnp.int32, s_all.shape, 1)
            s_all = jnp.where(lane < s_valid, s_all, -jnp.inf)
        m = jnp.max(s_all, axis=-1, keepdims=True)
        e = jnp.exp(s_all - m)
        denom = jnp.sum(e, axis=-1, keepdims=True)
        out_ref[...] = e * pl.reciprocal(denom, approx=True)   # EUP, not VALU div


def prepare_attention(encoder_outputs, w_attn, b_attn, v_w, *, b_tile=8, lane=128):
    """Per-sequence preparation (hoisted out of the decode loop): slice the two
    halves of the attn weight, reshape bias / v, and zero-pad everything to
    TPU-friendly shapes.  Zero padding is exact for this module (padded weight
    rows / bias / v entries are zero; padded src rows are masked in-kernel)."""
    S, B, H = encoder_outputs.shape
    assert w_attn.shape == (H, 2 * H) and b_attn.shape == (H,) and v_w.shape == (1, H)

    Hp = _round_up(H, lane)                     # MXU / vreg lane fill
    Bp = _round_up(B, b_tile)                   # sublane fill
    tS = lane if S >= lane else _round_up(S, 8) # lane-dense S chunks at scale
    Sp = _round_up(S, tS)

    enc_p = jnp.pad(encoder_outputs, ((0, Sp - S), (0, Bp - B), (0, Hp - H)))
    # cat((hidden, enc), dim=2) @ W.T == hidden @ W[:, :H].T + enc @ W[:, H:].T
    wh_p = jnp.pad(w_attn[:, :H], ((0, Hp - H), (0, Hp - H)))
    we_p = jnp.pad(w_attn[:, H:], ((0, Hp - H), (0, Hp - H)))
    b_p = jnp.pad(b_attn.reshape(1, H), ((0, 0), (0, Hp - H)))
    v_p = jnp.pad(v_w.reshape(1, H), ((0, 0), (0, Hp - H)))

    return dict(enc=enc_p, wh=wh_p, we=we_p, b=b_p, v=v_p,
                dims=(S, B, H, Sp, Bp, Hp, tS, b_tile))


def bahdanau_attention(hidden, prepared):
    """hidden: [B, H] decoder hidden state.  Returns [S, B] attention weights
    (softmax over axis 0), float32 — matching the PyTorch module."""
    S, B, H, Sp, Bp, Hp, tS, tb = prepared["dims"]
    assert hidden.shape == (B, H)

    hid_p = jnp.pad(hidden, ((0, Bp - B), (0, Hp - H)))
    nb, ns = Bp // tb, Sp // tS
    isz = prepared["enc"].dtype.itemsize

    # Advisory cost estimate so XLA can schedule surrounding decoder ops.
    cost = pl.CostEstimate(
        flops=2 * Sp * Bp * Hp * Hp + 2 * Bp * Hp * Hp + 2 * Sp * Bp * Hp,
        transcendentals=Sp * Bp * Hp + Bp * Sp,
        bytes_accessed=(Sp * Bp * Hp + Bp * Hp + 2 * Hp * Hp + 2 * Hp) * isz
                       + Bp * Sp * 4)

    # VMEM budget: double-buffered encoder tile + resident weights + f32
    # intermediates; clamped to v7x's 64 MiB physical VMEM.
    vmem_est = (2 * tS * tb * Hp * isz + 4 * Hp * Hp * isz + 2 * tb * Hp * isz
                + 2 * tb * Sp * 4 + tb * Hp * 4 + Sp * tb * 4
                + 3 * tS * tb * Hp * 4)
    vmem_limit = int(min(64 * 2**20, max(32 * 2**20, 2 * vmem_est)))

    out = pl.pallas_call(
        functools.partial(attention_kernel, s_valid=S),
        out_shape=jax.ShapeDtypeStruct((Bp, Sp), jnp.float32),
        grid_spec=pltpu.PrefetchScalarGridSpec(
            num_scalar_prefetch=0,
            grid=(nb, ns),                                 # (batch, src) tiles
            in_specs=[
                pl.BlockSpec((tb, Hp), lambda bi, si: (bi, 0)),
                pl.BlockSpec((tS, tb, Hp), lambda bi, si: (si, bi, 0)),
                pl.BlockSpec((Hp, Hp), lambda bi, si: (0, 0)),
                pl.BlockSpec((Hp, Hp), lambda bi, si: (0, 0)),
                pl.BlockSpec((1, Hp), lambda bi, si: (0, 0)),
                pl.BlockSpec((1, Hp), lambda bi, si: (0, 0)),
            ],
            out_specs=pl.BlockSpec((tb, Sp), lambda bi, si: (bi, 0)),
            scratch_shapes=[pltpu.VMEM((tb, Hp), jnp.float32),
                            pltpu.VMEM((Sp, tb), jnp.float32)],
        ),
        compiler_params=pltpu.CompilerParams(
            dimension_semantics=("parallel", "arbitrary"),
            vmem_limit_bytes=vmem_limit),
        cost_estimate=cost,
    )(hid_p, prepared["enc"], prepared["wh"], prepared["we"],
      prepared["b"], prepared["v"])

    # Back to the PyTorch layout: [S, B], softmax over axis 0.
    return out[:B, :S].T


def reference_attention(hidden, encoder_outputs, w_attn, b_attn, v_w):
    """Pure-JAX reference mirroring the PyTorch forward exactly (f32)."""
    S = encoder_outputs.shape[0]
    hidden_rep = jnp.broadcast_to(hidden[None, :, :], (S,) + hidden.shape)
    cat = jnp.concatenate([hidden_rep, encoder_outputs], axis=2)      # [S, B, 2H]
    energy = jnp.tanh(cat @ w_attn.T + b_attn)                        # [S, B, H]
    attention = (energy @ v_w.T)[..., 0]                              # [S, B]
    return jax.nn.softmax(attention, axis=0)


def _make_case(key, B, H, S):
    k1, k2, k3, k4, k5 = jax.random.split(key, 5)
    bound_attn = 1.0 / jnp.sqrt(2.0 * H)
    w_attn = jax.random.uniform(k1, (H, 2 * H), jnp.float32, -bound_attn, bound_attn)
    b_attn = jax.random.uniform(k2, (H,), jnp.float32, -bound_attn, bound_attn)
    bound_v = 1.0 / jnp.sqrt(1.0 * H)
    v_w = jax.random.uniform(k3, (1, H), jnp.float32, -bound_v, bound_v)
    hidden = jax.random.normal(k4, (B, H), jnp.float32)
    enc = jax.random.normal(k5, (S, B, H), jnp.float32)
    return hidden, enc, w_attn, b_attn, v_w


def _run_case(hidden, enc, w_attn, b_attn, v_w, dtype, atol):
    ref = reference_attention(hidden, enc, w_attn, b_attn, v_w)
    prepared = prepare_attention(enc.astype(dtype), w_attn.astype(dtype),
                                 b_attn.astype(dtype), v_w.astype(dtype))
    out = jax.block_until_ready(bahdanau_attention(hidden.astype(dtype), prepared))
    S, B = enc.shape[0], enc.shape[1]
    assert out.shape == (S, B), out.shape
    assert jnp.allclose(out, ref, atol=atol, rtol=atol), \
        f"mismatch vs reference ({dtype}), max err {jnp.max(jnp.abs(out - ref))}"
    assert jnp.allclose(jnp.sum(out, axis=0), 1.0, atol=1e-2), "softmax not normalized"
    return out


if __name__ == "__main__":
    key = jax.random.PRNGKey(0)
    k_small, k_big = jax.random.split(key)

    # Small shapes implied by the module (single-tile path): B=2, H=32, S=8.
    case_small = _make_case(k_small, B=2, H=32, S=8)
    _run_case(*case_small, dtype=jnp.float32, atol=5e-3)

    # Multi-tile path: 2 batch tiles (parallel axis) x 2 src tiles (pipelined,
    # lane-dense 128-wide output chunks), with zero padding in every dim.
    case_big = _make_case(k_big, B=10, H=96, S=200)
    _run_case(*case_big, dtype=jnp.float32, atol=5e-3)

    # bf16 storage path (half the HBM bytes; f32 accumulation/softmax inside).
    _run_case(*case_big, dtype=jnp.bfloat16, atol=2e-2)

    print("KERNEL_OK")
</pallas_src>

<mosaic_0001>
module attributes {stable_mosaic.version = 11 : i64} {
  func.func @attention_kernel(%arg0: i32, %arg1: i32, %arg2: memref<8x128xf32, #tpu.memory_space<vmem>>, %arg3: memref<8x8x128xf32, #tpu.memory_space<vmem>>, %arg4: memref<128x128xf32, #tpu.memory_space<vmem>>, %arg5: memref<128x128xf32, #tpu.memory_space<vmem>>, %arg6: memref<1x128xf32, #tpu.memory_space<vmem>>, %arg7: memref<1x128xf32, #tpu.memory_space<vmem>>, %arg8: memref<8x8xf32, #tpu.memory_space<vmem>>, %arg9: memref<8x128xf32, #tpu.memory_space<vmem>>, %arg10: memref<8x8xf32, #tpu.memory_space<vmem>>) attributes {dimension_semantics = [#tpu.dimension_semantics<parallel>, #tpu.dimension_semantics<arbitrary>], iteration_bounds = array<i64: 1, 1>, scalar_prefetch = 0 : i64, scratch_operands = 2 : i64, tpu.core_type = #tpu.core_type<tc>, window_params = [{transform_indices = @transform_0, window_bounds = array<i64: 8, 128>}, {transform_indices = @transform_1, window_bounds = array<i64: 8, 8, 128>}, {pipeline_mode = #tpu.pipeline_mode<synchronous>, transform_indices = @transform_2, window_bounds = array<i64: 128, 128>}, {pipeline_mode = #tpu.pipeline_mode<synchronous>, transform_indices = @transform_3, window_bounds = array<i64: 128, 128>}, {pipeline_mode = #tpu.pipeline_mode<synchronous>, transform_indices = @transform_4, window_bounds = array<i64: 1, 128>}, {pipeline_mode = #tpu.pipeline_mode<synchronous>, transform_indices = @transform_5, window_bounds = array<i64: 1, 128>}, {transform_indices = @transform_6, window_bounds = array<i64: 8, 8>}]} {
    %c0_i32 = arith.constant 0 : i32
    %0 = arith.cmpi eq, %arg1, %c0_i32 : i32
    %1 = arith.extui %0 : i1 to i32
    %c0_i32_0 = arith.constant 0 : i32
    %2 = arith.cmpi ne, %1, %c0_i32_0 : i32
    scf.if %2 {
      %c0_13 = arith.constant 0 : index
      %c0_14 = arith.constant 0 : index
      %25 = vector.load %arg2[%c0_13, %c0_14] : memref<8x128xf32, #tpu.memory_space<vmem>>, vector<8x128xf32>
      %c0_15 = arith.constant 0 : index
      %c0_16 = arith.constant 0 : index
      %26 = vector.load %arg4[%c0_15, %c0_16] : memref<128x128xf32, #tpu.memory_space<vmem>>, vector<128x128xf32>
      %cst_17 = arith.constant dense<0.000000e+00> : vector<8x128xf32>
      %27 = tpu.matmul %25, %26, %cst_17 {dimension_numbers = #tpu.dot_dimension_numbers<[1], [1], [0], [0], [0, 0, 1, 0], [], []>} : vector<8x128xf32>, vector<128x128xf32>, vector<8x128xf32> -> vector<8x128xf32>
      %c0_18 = arith.constant 0 : index
      %c0_19 = arith.constant 0 : index
      %28 = vector.load %arg6[%c0_18, %c0_19] : memref<1x128xf32, #tpu.memory_space<vmem>>, vector<1x128xf32>
      %29 = vector.broadcast %28 : vector<1x128xf32> to vector<8x128xf32>
      %30 = arith.addf %27, %29 : vector<8x128xf32>
      %c0_20 = arith.constant 0 : index
      %c0_21 = arith.constant 0 : index
      %31 = vector.load %arg9[%c0_20, %c0_21] : memref<8x128xf32, #tpu.memory_space<vmem>>, vector<8x128xf32>
      tpu.vector_store %arg9[%c0_20, %c0_21], %30 {strides = array<i32>} : memref<8x128xf32, #tpu.memory_space<vmem>>, vector<8x128xf32>,
    } else {
    }
    %c0 = arith.constant 0 : index
    %c0_1 = arith.constant 0 : index
    %c0_2 = arith.constant 0 : index
    %3 = vector.load %arg3[%c0, %c0_1, %c0_2] : memref<8x8x128xf32, #tpu.memory_space<vmem>>, vector<8x8x128xf32>
    %4 = vector.shape_cast %3 : vector<8x8x128xf32> to vector<64x128xf32>
    %c0_3 = arith.constant 0 : index
    %c0_4 = arith.constant 0 : index
    %5 = vector.load %arg5[%c0_3, %c0_4] : memref<128x128xf32, #tpu.memory_space<vmem>>, vector<128x128xf32>
    %cst = arith.constant dense<0.000000e+00> : vector<64x128xf32>
    %6 = tpu.matmul %4, %5, %cst {dimension_numbers = #tpu.dot_dimension_numbers<[1], [1], [0], [0], [0, 0, 1, 0], [], []>} : vector<64x128xf32>, vector<128x128xf32>, vector<64x128xf32> -> vector<64x128xf32>
    %7 = vector.shape_cast %6 : vector<64x128xf32> to vector<8x8x128xf32>
    %c0_5 = arith.constant 0 : index
    %c0_6 = arith.constant 0 : index
    %8 = vector.load %arg9[%c0_5, %c0_6] : memref<8x128xf32, #tpu.memory_space<vmem>>, vector<8x128xf32>
    %9 = vector.shape_cast %8 : vector<8x128xf32> to vector<1x8x128xf32>
    %10 = vector.broadcast %9 : vector<1x8x128xf32> to vector<8x8x128xf32>
    %11 = arith.addf %7, %10 : vector<8x8x128xf32>
    %12 = math.tanh %11 : vector<8x8x128xf32>
    %c0_7 = arith.constant 0 : index
    %c0_8 = arith.constant 0 : index
    %13 = vector.load %arg7[%c0_7, %c0_8] : memref<1x128xf32, #tpu.memory_space<vmem>>, vector<1x128xf32>
    %14 = vector.shape_cast %13 : vector<1x128xf32> to vector<1x1x128xf32>
    %15 = vector.broadcast %14 : vector<1x1x128xf32> to vector<8x8x128xf32>
    %16 = arith.mulf %12, %15 : vector<8x8x128xf32>
    %cst_9 = arith.constant dense<0.000000e+00> : vector<8x8xf32>
    %17 = vector.multi_reduction <add>, %16, %cst_9 [2] : vector<8x8x128xf32> to vector<8x8xf32>
    %c8_i32 = arith.constant 8 : i32
    %18 = arith.muli %arg1, %c8_i32 : i32
    %19 = tpu.assume_multiple %18, 8 : i32
    %20 = arith.index_cast %19 : i32 to index
    %c0_10 = arith.constant 0 : index
    %21 = vector.load %arg10[%20, %c0_10] : memref<8x8xf32, #tpu.memory_space<vmem>>, vector<8x8xf32>
    tpu.vector_store %arg10[%20, %c0_10], %17 {strides = array<i32>} : memref<8x8xf32, #tpu.memory_space<vmem>>, vector<8x8xf32>,
    %c0_i32_11 = arith.constant 0 : i32
    %22 = arith.cmpi eq, %arg1, %c0_i32_11 : i32
    %23 = arith.extui %22 : i1 to i32
    %c0_i32_12 = arith.constant 0 : i32
    %24 = arith.cmpi ne, %23, %c0_i32_12 : i32
    scf.if %24 {
      %c0_13 = arith.constant 0 : index
      %c0_14 = arith.constant 0 : index
      %25 = vector.load %arg10[%c0_13, %c0_14] : memref<8x8xf32, #tpu.memory_space<vmem>>, vector<8x8xf32>
      %26 = tpu.transpose %25, [1, 0] : vector<8x8xf32> -> vector<8x8xf32>
      %cst_15 = arith.constant dense<0xFF800000> : vector<8xf32>
      %27 = vector.multi_reduction <maximumf>, %26, %cst_15 [1] : vector<8x8xf32> to vector<8xf32>
      %28 = vector.shape_cast %27 : vector<8xf32> to vector<8x1xf32>
      %29 = vector.broadcast %28 : vector<8x1xf32> to vector<8x8xf32>
      %30 = arith.subf %26, %29 : vector<8x8xf32>
      %31 = math.exp %30 : vector<8x8xf32>
      %cst_16 = arith.constant dense<0.000000e+00> : vector<8xf32>
      %32 = vector.multi_reduction <add>, %31, %cst_16 [1] : vector<8x8xf32> to vector<8xf32>
      %33 = vector.shape_cast %32 : vector<8xf32> to vector<8x1xf32>
      %34 = tpu.reciprocal %33 {approx = true} : vector<8x1xf32> -> vector<8x1xf32>
      %35 = vector.broadcast %34 : vector<8x1xf32> to vector<8x8xf32>
      %36 = arith.mulf %31, %35 : vector<8x8xf32>
      %c0_17 = arith.constant 0 : index
      %c0_18 = arith.constant 0 : index
      %37 = vector.load %arg8[%c0_17, %c0_18] : memref<8x8xf32, #tpu.memory_space<vmem>>, vector<8x8xf32>
      tpu.vector_store %arg8[%c0_17, %c0_18], %36 {strides = array<i32>} : memref<8x8xf32, #tpu.memory_space<vmem>>, vector<8x8xf32>,
    } else {
    }
    return
  }
  func.func @transform_0(%arg0: i32, %arg1: i32) -> (i32, i32) {
    %c0_i32 = arith.constant 0 : i32
    %c0_i32_0 = arith.constant 0 : i32
    return %arg0, %c0_i32 : i32, i32
  }
  func.func @transform_1(%arg0: i32, %arg1: i32) -> (i32, i32, i32) {
    %c0_i32 = arith.constant 0 : i32
    %c0_i32_0 = arith.constant 0 : i32
    return %arg1, %arg0, %c0_i32 : i32, i32, i32
  }
  func.func @transform_2(%arg0: i32, %arg1: i32) -> (i32, i32) {
    %c0_i32 = arith.constant 0 : i32
    %c0_i32_0 = arith.constant 0 : i32
    %c0_i32_1 = arith.constant 0 : i32
    return %c0_i32, %c0_i32_0 : i32, i32
  }
  func.func @transform_3(%arg0: i32, %arg1: i32) -> (i32, i32) {
    %c0_i32 = arith.constant 0 : i32
    %c0_i32_0 = arith.constant 0 : i32
    %c0_i32_1 = arith.constant 0 : i32
    return %c0_i32, %c0_i32_0 : i32, i32
  }
  func.func @transform_4(%arg0: i32, %arg1: i32) -> (i32, i32) {
    %c0_i32 = arith.constant 0 : i32
    %c0_i32_0 = arith.constant 0 : i32
    %c0_i32_1 = arith.constant 0 : i32
    return %c0_i32, %c0_i32_0 : i32, i32
  }
  func.func @transform_5(%arg0: i32, %arg1: i32) -> (i32, i32) {
    %c0_i32 = arith.constant 0 : i32
    %c0_i32_0 = arith.constant 0 : i32
    %c0_i32_1 = arith.constant 0 : i32
    return %c0_i32, %c0_i32_0 : i32, i32
  }
  func.func @transform_6(%arg0: i32, %arg1: i32) -> (i32, i32) {
    %c0_i32 = arith.constant 0 : i32
    %c0_i32_0 = arith.constant 0 : i32
    return %arg0, %c0_i32 : i32, i32
  }
}

</mosaic_0001>

<llo_original>
// kernel: tpu_custom_call.1
$region0: #{tpu_custom_call.1}
  #allocation0 [shape = 'u32[]', space=smem, size = 0x4, offset = 0x4, fixed_abs, tag = 'smem constant byte address 0x4 - core index']
  #allocation1 [shape = 'u32[72,128]{1,0:T(1,128)}', space=vmem, size = 0x9000, scoped, tag = 'internal scratch']
  #allocation2 [shape = 'f32[8,128]{1,0:T(8,128)}', space=vmem, size = 0x1000, scoped, tag = 'scratch operand']
  #allocation3 [shape = 'f32[8,8]{1,0:T(8,128)}', space=vmem, size = 0x1000, scoped, tag = 'scratch operand']
  %s0 = inlined_call_operand.hbm [shape: f32[8,128], index: 0, kind: input, shape index: {}]
  %s1 = inlined_call_operand.hbm [shape: f32[8,8,128], index: 1, kind: input, shape index: {}]
  %s2 = inlined_call_operand.hbm [shape: f32[128,128], index: 2, kind: input, shape index: {}]
  %s3 = inlined_call_operand.hbm [shape: f32[128,128], index: 3, kind: input, shape index: {}]
  %s4 = inlined_call_operand.vmem [shape: f32[1,128], index: 4, kind: input, shape index: {}]
  %s5 = inlined_call_operand.vmem [shape: f32[1,128], index: 5, kind: input, shape index: {}]
  %s6 = inlined_call_operand.hbm [shape: f32[8,8], index: 6, kind: output, shape index: {}]
  %s7 = sld [smem:[#allocation0]]
  $region58: #{tpu_custom_call.1} parent=0
    _
  %s9 = ssub.s32 1, %s7
  %s10 = scalar_select 0, %s9, %s7
  $region1: #{tpu_custom_call.1} parent=0
    #allocation4 [shape = 'u8[4096]{0}', space=vmem, size = 0x1000, scoped, tag = 'input window, operand 0, single buffered']
    #allocation5 [shape = 's32[1]{0}', space=sflag, size = 0x4, scoped, tag = 'scoped memory for tpu_custom_call.1']
    #allocation6 [shape = 's32[1]{0}', space=sflag, size = 0x4, scoped, tag = 'scoped memory for tpu_custom_call.1']
    #allocation7 [shape = 'u8[32768]{0}', space=vmem, size = 0x8000, scoped, tag = 'input window, operand 1, single buffered']
    #allocation8 [shape = 's32[1]{0}', space=sflag, size = 0x4, scoped, tag = 'scoped memory for tpu_custom_call.1']
    #allocation9 [shape = 'u8[65536]{0}', space=vmem, size = 0x10000, scoped, tag = 'input window, operand 2, single buffered']
    #allocation10 [shape = 'u8[65536]{0}', space=vmem, size = 0x10000, scoped, tag = 'input window, operand 3, single buffered']
    #allocation11 [shape = 's32[1]{0}', space=sflag, size = 0x4, scoped, tag = 'scoped memory for tpu_custom_call.1']
    #allocation12 [shape = 'u8[4096]{0}', space=vmem, size = 0x1000, scoped, tag = 'output window, operand 0, single buffered']
    %11 = vsyncpa [#allocation5], 0
    %12 = vsyncpa [#allocation8], 0
    %13 = vsyncpa [#allocation11], 0
    %14 = vsyncpa [#allocation6], 0
    // Predicated region
    $region2: #{tpu_custom_call.1} parent=1 // pred_check
      _
    $region3: #{tpu_custom_call.1} parent=1 // pred_check_branch
      %16 = sbr.rel (0) target = $region5
    $region4: #{tpu_custom_call.1} parent=1 // pred_region
      %18 = vsyncadd [#allocation5], 0
      %s20 = sshll.u32 %s0, 4
      %s21 = int_to_ptr.hbm [resolvable:$true] %s20
      %s22 = sshll.u32 [#allocation4], 4
      %s23 = int_to_ptr.vmem [resolvable:$true] %s22
      %25 = dma.hbm_to_vmem [thread:$0]  %s21, 128, %s23, [#allocation5]
    $region5: #{tpu_custom_call.1} parent=1 // pred_fallthru
      _
    // Predicated region
    $region6: #{tpu_custom_call.1} parent=1 // pred_check
      _
    $region7: #{tpu_custom_call.1} parent=1 // pred_check_branch
      %27 = sbr.rel (0) target = $region9
    $region8: #{tpu_custom_call.1} parent=1 // pred_region
      %29 = vsyncadd [#allocation8], 0
      %s30 = sshll.u32 %s1, 4
      %s31 = int_to_ptr.hbm [resolvable:$true] %s30
      %s32 = sshll.u32 [#allocation7], 4
      %s33 = int_to_ptr.vmem [resolvable:$true] %s32
      %38 = dma.hbm_to_vmem [thread:$0]  %s31, 1024, %s33, [#allocation8], 128, 128, 8
    $region9: #{tpu_custom_call.1} parent=1 // pred_fallthru
      _
    // Predicated region
    $region10: #{tpu_custom_call.1} parent=1 // pred_check
      _
    $region11: #{tpu_custom_call.1} parent=1 // pred_check_branch
      %40 = sbr.rel (0) target = $region13
    $region12: #{tpu_custom_call.1} parent=1 // pred_region
      %42 = vsyncadd [#allocation8], 0
      %s43 = sshll.u32 %s2, 4
      %s44 = int_to_ptr.hbm [resolvable:$true] %s43
      %s45 = sshll.u32 [#allocation9], 4
      %s46 = int_to_ptr.vmem [resolvable:$true] %s45
      %51 = dma.hbm_to_vmem [thread:$0]  %s44, 2048, %s46, [#allocation8], 128, 128, 8
    $region13: #{tpu_custom_call.1} parent=1 // pred_fallthru
      _
    // Predicated region
    $region14: #{tpu_custom_call.1} parent=1 // pred_check
      _
    $region15: #{tpu_custom_call.1} parent=1 // pred_check_branch
      %53 = sbr.rel (0) target = $region17
    $region16: #{tpu_custom_call.1} parent=1 // pred_region
      %55 = vsyncadd [#allocation11], 0
      %s56 = sshll.u32 %s3, 4
      %s57 = int_to_ptr.hbm [resolvable:$true] %s56
      %s58 = sshll.u32 [#allocation10], 4
      %s59 = int_to_ptr.vmem [resolvable:$true] %s58
      %64 = dma.hbm_to_vmem [thread:$0]  %s57, 2048, %s59, [#allocation11], 128, 128, 8
    $region17: #{tpu_custom_call.1} parent=1 // pred_fallthru
      _
    // Predicated region
    $region18: #{tpu_custom_call.1} parent=1 // pred_check
      _
    $region19: #{tpu_custom_call.1} parent=1 // pred_check_branch
      %66 = sbr.rel (0) target = $region21
    $region20: #{tpu_custom_call.1} parent=1 // pred_region
      _
    $region21: #{tpu_custom_call.1} parent=1 // pred_fallthru
      _
    // Predicated region
    $region22: #{tpu_custom_call.1} parent=1 // pred_check
      _
    $region23: #{tpu_custom_call.1} parent=1 // pred_check_branch
      %68 = sbr.rel (0) target = $region25
    $region24: #{tpu_custom_call.1} parent=1 // pred_region
      _
    $region25: #{tpu_custom_call.1} parent=1 // pred_fallthru
      _
    // Predicated region
    $region26: #{tpu_custom_call.1} parent=1 // pred_check
      _
    $region27: #{tpu_custom_call.1} parent=1 // pred_check_branch
      %70 = sbr.rel (0) target = $region29
    $region28: #{tpu_custom_call.1} parent=1 // pred_region
      %72 = dma.done [#allocation5], 128
    $region29: #{tpu_custom_call.1} parent=1 // pred_fallthru
      _
    // Predicated region
    $region30: #{tpu_custom_call.1} parent=1 // pred_check
      _
    $region31: #{tpu_custom_call.1} parent=1 // pred_check_branch
      %74 = sbr.rel (0) target = $region33
    $region32: #{tpu_custom_call.1} parent=1 // pred_region
      %76 = dma.done [#allocation8], 1024
    $region33: #{tpu_custom_call.1} parent=1 // pred_fallthru
      _
    // Predicated region
    $region34: #{tpu_custom_call.1} parent=1 // pred_check
      _
    $region35: #{tpu_custom_call.1} parent=1 // pred_check_branch
      %78 = sbr.rel (0) target = $region37
    $region36: #{tpu_custom_call.1} parent=1 // pred_region
      %80 = dma.done [#allocation8], 2048
    $region37: #{tpu_custom_call.1} parent=1 // pred_fallthru
      _
    // Predicated region
    $region38: #{tpu_custom_call.1} parent=1 // pred_check
      _
    $region39: #{tpu_custom_call.1} parent=1 // pred_check_branch
      %82 = sbr.rel (0) target = $region41
    $region40: #{tpu_custom_call.1} parent=1 // pred_region
      %84 = dma.done [#allocation11], 2048
    $region41: #{tpu_custom_call.1} parent=1 // pred_fallthru
      _
    %p85 = scmp.eq.s32.totalorder 0, 0
    // Predicated region
    $region42: #{tpu_custom_call.1} parent=1 // pred_check
      %p86 = pneg %p85
    $region43: #{tpu_custom_call.1} parent=1 // pred_check_branch
      %88 = sbr.rel (%p86) target = $region45
    $region44: #{tpu_custom_call.1} parent=1 // pred_region
      %v89 = vld [vmem:[#allocation4] sm:$0xff]
      %v90 = vld [vmem:[#allocation9] sm:$0xff]
      %v91 = vld [vmem:[#allocation9 + $0x8] sm:$0xff]
      %v92 = vld [vmem:[#allocation9 + $0x10] sm:$0xff]
      %v93 = vld [vmem:[#allocation9 + $0x18] sm:$0xff]
      %v94 = vld [vmem:[#allocation9 + $0x20] sm:$0xff]
      %v95 = vld [vmem:[#allocation9 + $0x28] sm:$0xff]
      %v96 = vld [vmem:[#allocation9 + $0x30] sm:$0xff]
      %v97 = vld [vmem:[#allocation9 + $0x38] sm:$0xff]
      %v98 = vld [vmem:[#allocation9 + $0x40] sm:$0xff]
      %v99 = vld [vmem:[#allocation9 + $0x48] sm:$0xff]
      %v100 = vld [vmem:[#allocation9 + $0x50] sm:$0xff]
      %v101 = vld [vmem:[#allocation9 + $0x58] sm:$0xff]
      %v102 = vld [vmem:[#allocation9 + $0x60] sm:$0xff]
      %v103 = vld [vmem:[#allocation9 + $0x68] sm:$0xff]
      %v104 = vld [vmem:[#allocation9 + $0x70] sm:$0xff]
      %v105 = vld [vmem:[#allocation9 + $0x78] sm:$0xff]
      %v106 = vld [vmem:[%s4] sm:$0x1]
      %v108 = vperm.slane %v106, 0
      %110 = vmatpush.xpose.msra.mxu0 %v105
      %111 = vmatpush.xpose.msra.mxu0 %v104
      %112 = vmatpush.xpose.msra.mxu0 %v103
      %113 = vmatpush.xpose.msra.mxu0 %v102
      %114 = vmatpush.xpose.msra.mxu0 %v101
      %115 = vmatpush.xpose.msra.mxu0 %v100
      %116 = vmatpush.xpose.msra.mxu0 %v99
      %117 = vmatpush.xpose.msra.mxu0 %v98
      %118 = vmatpush.xpose.msra.mxu0 %v97
      %119 = vmatpush.xpose.msra.mxu0 %v96
      %120 = vmatpush.xpose.msra.mxu0 %v95
      %121 = vmatpush.xpose.msra.mxu0 %v94
      %122 = vmatpush.xpose.msra.mxu0 %v93
      %123 = vmatpush.xpose.msra.mxu0 %v92
      %124 = vmatpush.xpose.msra.mxu0 %v91
      %125 = vmatpush.xpose.msra.mxu0 %v90
      %126 = vmatmul.f32.gmra.mxu0 %v89
      %v127 = vpop.f32.mrf.mxu0
      %v128 = vadd.f32 %v108, %v127
      %129 = vdwg.mxu0
      %130 = vst [vmem:[#allocation2] sm:$0xff] %v128
    $region45: #{tpu_custom_call.1} parent=1 // pred_fallthru
      _
    %v131 = vld [vmem:[#allocation7] sm:$0xff]
    %v132 = vld [vmem:[#allocation7 + $0x8] sm:$0xff]
    %v133 = vld [vmem:[#allocation7 + $0x10] sm:$0xff]
    %v134 = vld [vmem:[#allocation7 + $0x18] sm:$0xff]
    %v135 = vld [vmem:[#allocation7 + $0x20] sm:$0xff]
    %v136 = vld [vmem:[#allocation7 + $0x28] sm:$0xff]
    %v137 = vld [vmem:[#allocation7 + $0x30] sm:$0xff]
    %v138 = vld [vmem:[#allocation7 + $0x38] sm:$0xff]
    %v139 = vld [vmem:[#allocation10] sm:$0xff]
    %v140 = vld [vmem:[#allocation10 + $0x8] sm:$0xff]
    %v141 = vld [vmem:[#allocation10 + $0x10] sm:$0xff]
    %v142 = vld [vmem:[#allocation10 + $0x18] sm:$0xff]
    %v143 = vld [vmem:[#allocation10 + $0x20] sm:$0xff]
    %v144 = vld [vmem:[#allocation10 + $0x28] sm:$0xff]
    %v145 = vld [vmem:[#allocation10 + $0x30] sm:$0xff]
    %v146 = vld [vmem:[#allocation10 + $0x38] sm:$0xff]
    %v147 = vld [vmem:[#allocation10 + $0x40] sm:$0xff]
    %v148 = vld [vmem:[#allocation10 + $0x48] sm:$0xff]
    %v149 = vld [vmem:[#allocation10 + $0x50] sm:$0xff]
    %v150 = vld [vmem:[#allocation10 + $0x58] sm:$0xff]
    %v151 = vld [vmem:[#allocation10 + $0x60] sm:$0xff]
    %v152 = vld [vmem:[#allocation10 + $0x68] sm:$0xff]
    %v153 = vld [vmem:[#allocation10 + $0x70] sm:$0xff]
    %v154 = vld [vmem:[#allocation10 + $0x78] sm:$0xff]
    %155 = vmatpush.xpose.msra.mxu0 %v154
    %156 = vmatpush.xpose.msra.mxu0 %v153
    %157 = vmatpush.xpose.msra.mxu0 %v152
    %158 = vmatpush.xpose.msra.mxu0 %v151
    %159 = vmatpush.xpose.msra.mxu0 %v150
    %160 = vmatpush.xpose.msra.mxu0 %v149
    %161 = vmatpush.xpose.msra.mxu0 %v148
    %162 = vmatpush.xpose.msra.mxu0 %v147
    %163 = vmatpush.xpose.msra.mxu0 %v146
    %164 = vmatpush.xpose.msra.mxu0 %v145
    %165 = vmatpush.xpose.msra.mxu0 %v144
    %166 = vmatpush.xpose.msra.mxu0 %v143
    %167 = vmatpush.xpose.msra.mxu0 %v142
    %168 = vmatpush.xpose.msra.mxu0 %v141
    %169 = vmatpush.xpose.msra.mxu0 %v140
    %170 = vmatpush.xpose.msra.mxu0 %v139
    %171 = vmatmul.f32.gmra.mxu0 %v131
    %v172 = vpop.f32.mrf.mxu0
    %v173 = vadd.f32 0.0, %v172
    %174 = vmatmul.f32.gmra.mxu0 %v132
    %v175 = vpop.f32.mrf.mxu0
    %v176 = vadd.f32 0.0, %v175
    %177 = vmatmul.f32.gmra.mxu0 %v133
    %v178 = vpop.f32.mrf.mxu0
    %v179 = vadd.f32 0.0, %v178
    %180 = vmatmul.f32.gmra.mxu0 %v134
    %v181 = vpop.f32.mrf.mxu0
    %v182 = vadd.f32 0.0, %v181
    %183 = vmatmul.f32.gmra.mxu0 %v135
    %v184 = vpop.f32.mrf.mxu0
    %v185 = vadd.f32 0.0, %v184
    %186 = vmatmul.f32.gmra.mxu0 %v136
    %v187 = vpop.f32.mrf.mxu0
    %v188 = vadd.f32 0.0, %v187
    %189 = vmatmul.f32.gmra.mxu0 %v137
    %v190 = vpop.f32.mrf.mxu0
    %v191 = vadd.f32 0.0, %v190
    %192 = vmatmul.f32.gmra.mxu0 %v138
    %v193 = vpop.f32.mrf.mxu0
    %v194 = vadd.f32 0.0, %v193
    %195 = vdwg.mxu0
    %v196 = vld [vmem:[#allocation2] sm:$0xff]
    %v197 = vadd.f32 %v173, %v196
    %v198 = vadd.f32 %v176, %v196
    %v199 = vadd.f32 %v179, %v196
    %v200 = vadd.f32 %v182, %v196
    %v201 = vadd.f32 %v185, %v196
    %v202 = vadd.f32 %v188, %v196
    %v203 = vadd.f32 %v191, %v196
    %v204 = vadd.f32 %v194, %v196
    %v205 = vtanh.pop %v197
    %v206 = vtanh.pop %v198
    %v207 = vtanh.pop %v199
    %v208 = vtanh.pop %v200
    %v209 = vtanh.pop %v201
    %v210 = vtanh.pop %v202
    %v211 = vtanh.pop %v203
    %v212 = vtanh.pop %v204
    %v213 = vld [vmem:[%s5] sm:$0x1]
    %v215 = vperm.slane %v213, 0
    %v217 = vmul.f32 %v205, %v215
    %v218 = vmul.f32 %v206, %v215
    %v219 = vmul.f32 %v207, %v215
    %v220 = vmul.f32 %v208, %v215
    %v221 = vmul.f32 %v209, %v215
    %v222 = vmul.f32 %v210, %v215
    %v223 = vmul.f32 %v211, %v215
    %v224 = vmul.f32 %v212, %v215
    %225 = vadd.xlane.f32.xlu0 %v217
    %v226 = vpop.xlane.xlu0 %225
    %227 = vadd.xlane.f32.xlu0 %v218
    %v228 = vpop.xlane.xlu0 %227
    %229 = vadd.xlane.f32.xlu0 %v219
    %v230 = vpop.xlane.xlu0 %229
    %231 = vadd.xlane.f32.xlu0 %v220
    %v232 = vpop.xlane.xlu0 %231
    %233 = vadd.xlane.f32.xlu0 %v221
    %v234 = vpop.xlane.xlu0 %233
    %235 = vadd.xlane.f32.xlu0 %v222
    %v236 = vpop.xlane.xlu0 %235
    %237 = vadd.xlane.f32.xlu0 %v223
    %v238 = vpop.xlane.xlu0 %237
    %239 = vadd.xlane.f32.xlu0 %v224
    %v240 = vpop.xlane.xlu0 %239
    %s241 = smul.u32 0, 8
    %v250 = vlaneseq
    %v251 = vand.u32 %v250, 127
    %v252 = vperm.slane %v226, %v251
    %v253 = vperm.slane %v228, %v251
    %v254 = vperm.slane %v230, %v251
    %v255 = vperm.slane %v232, %v251
    %v256 = vperm.slane %v234, %v251
    %v257 = vperm.slane %v236, %v251
    %v258 = vperm.slane %v238, %v251
    %v259 = vperm.slane %v240, %v251
    %vm260 = vcmask 1041409
    %v261 = vsel %vm260, %v253, %v252
    %vm262 = vcmask 1042434
    %v263 = vsel %vm262, %v254, %v261
    %vm264 = vcmask 1043459
    %v265 = vsel %vm264, %v255, %v263
    %vm266 = vcmask 1044484
    %v267 = vsel %vm266, %v256, %v265
    %vm268 = vcmask 1045509
    %v269 = vsel %vm268, %v257, %v267
    %vm270 = vcmask 1046534
    %v271 = vsel %vm270, %v258, %v269
    %vm272 = vcmask 1047559
    %v273 = vsel %vm272, %v259, %v271
    %s275 = scalar_lea.vmem [#allocation3], %s241
    %vm276 = vcmask 64512
    %277 = vst.msk [vmem:[%s275] sm:$0xff] %vm276, %v273
    // Predicated region
    $region46: #{tpu_custom_call.1} parent=1 // pred_check
      %p278 = pneg %p85
    $region47: #{tpu_custom_call.1} parent=1 // pred_check_branch
      %280 = sbr.rel (%p278) target = $region49
    $region48: #{tpu_custom_call.1} parent=1 // pred_region
      %v281 = vld [vmem:[#allocation3] sm:$0xff]
      %282 = vxpose.xlu0.b32.start [1/16] %v281, 128
      %283 = vxpose.xlu0.b32.cont [2/16] 0.0, 128
      %284 = vxpose.xlu0.b32.cont [3/16] 0.0, 128
      %285 = vxpose.xlu0.b32.cont [4/16] 0.0, 128
      %286 = vxpose.xlu0.b32.cont [5/16] 0.0, 128
      %287 = vxpose.xlu0.b32.cont [6/16] 0.0, 128
      %288 = vxpose.xlu0.b32.cont [7/16] 0.0, 128
      %289 = vxpose.xlu0.b32.cont [8/16] 0.0, 128
      %290 = vxpose.xlu0.b32.cont [9/16] 0.0, 128
      %291 = vxpose.xlu0.b32.cont [10/16] 0.0, 128
      %292 = vxpose.xlu0.b32.cont [11/16] 0.0, 128
      %293 = vxpose.xlu0.b32.cont [12/16] 0.0, 128
      %294 = vxpose.xlu0.b32.cont [13/16] 0.0, 128
      %295 = vxpose.xlu0.b32.cont [14/16] 0.0, 128
      %296 = vxpose.xlu0.b32.cont [15/16] 0.0, 128
      %297 = vxpose.xlu0.b32.end [16/16] 0.0, 128
      %v298 = vpop.trf.xlu0
      %v299 = vpop.trf.xlu0
      %v300 = vpop.trf.xlu0
      %v301 = vpop.trf.xlu0
      %v302 = vpop.trf.xlu0
      %v303 = vpop.trf.xlu0
      %v304 = vpop.trf.xlu0
      %v305 = vpop.trf.xlu0
      %v306 = vpop.trf.xlu0
      %v307 = vpop.trf.xlu0
      %v308 = vpop.trf.xlu0
      %v309 = vpop.trf.xlu0
      %v310 = vpop.trf.xlu0
      %v311 = vpop.trf.xlu0
      %v312 = vpop.trf.xlu0
      %v313 = vpop.trf.xlu0
      %v314 = vsel %vm276, %v298, -inf
      %315 = vmax.xlane.f32.xlu0 %v314
      %v316 = vpop.xlane.xlu0 %315
      %v317 = vsub.f32 %v298, %v316
      %v318 = vmul.f32 %v317, 1.442695
      %v319 = vpow.pop %v318
      %v320 = vsel %vm276, %v319, 0.0
      %321 = vadd.xlane.f32.xlu0 %v320
      %v322 = vpop.xlane.xlu0 %321
      %v323 = vrcp.pop %v322
      %v324 = vmul.f32 %v319, %v323
      %325 = vst.msk [vmem:[#allocation12] sm:$0xff] %vm276, %v324
    $region49: #{tpu_custom_call.1} parent=1 // pred_fallthru
      _
    // Predicated region
    $region50: #{tpu_custom_call.1} parent=1 // pred_check
      _
    $region51: #{tpu_custom_call.1} parent=1 // pred_check_branch
      %327 = sbr.rel (0) target = $region53
    $region52: #{tpu_custom_call.1} parent=1 // pred_region
      %329 = vsyncadd [#allocation6], 0
      %s331 = sshll.u32 [#allocation12], 4
      %s332 = int_to_ptr.vmem [resolvable:$true] %s331
      %s333 = sshll.u32 %s6, 4
      %s334 = int_to_ptr.hbm [resolvable:$true] %s333
      %336 = dma.vmem_to_hbm [thread:$0]  %s332, 128, %s334, [#allocation6]
    $region53: #{tpu_custom_call.1} parent=1 // pred_fallthru
      _
    // Predicated region
    $region54: #{tpu_custom_call.1} parent=1 // pred_check
      _
    $region55: #{tpu_custom_call.1} parent=1 // pred_check_branch
      %338 = sbr.rel (0) target = $region57
    $region56: #{tpu_custom_call.1} parent=1 // pred_region
      %340 = dma.done [#allocation6], 128
    $region57: #{tpu_custom_call.1} parent=1 // pred_fallthru
      _
    %341 = vsyncpa [#allocation5], 1
    %342 = vsyncpa [#allocation8], 1
    %343 = vsyncpa [#allocation11], 1
    %344 = vsyncpa [#allocation6], 1

</llo_original>
